<compile_context>
chip_gen: v5e
topology: v5e:2x2
jax: 0.10.0
libtpu: 0.0.40
codegen_flags: <defaults>
</compile_context>

<pallas_src>
import math
import functools

import jax
import jax.numpy as jnp
from jax.experimental import pallas as pl
from jax.experimental.pallas import tpu as pltpu


# ----------------------------------------------------------------------------
# In-kernel math helpers
# ----------------------------------------------------------------------------
def _recip(x):
    """1/x: EUP approximate reciprocal + one Newton-Raphson refinement.

    The seed comes from the (otherwise idle) EUP slot; the single NR step on
    the VALU restores ~f32 accuracy while still being cheaper than the full
    divide lowering (reciprocal + multiple Newton steps, all on the VALU).
    """
    r = pl.reciprocal(x, approx=True)
    return r * (2.0 - x * r)


def _atan(x):
    """f32 arctan with guaranteed Mosaic lowerings (lax.atan has none).

    Cephes atanf-style range reduction + degree-9 odd polynomial, |err|~1e-7.
    """
    sign = jnp.where(x < 0.0, jnp.float32(-1.0), jnp.float32(1.0))
    ax = jnp.abs(x)

    big = ax > 2.414213562373095      # tan(3*pi/8)
    mid = ax > 0.4142135623730951     # tan(pi/8)

    xr = jnp.where(big, -_recip(ax + 1e-30),
                   jnp.where(mid, (ax - 1.0) * _recip(ax + 1.0), ax))
    yb = jnp.where(big, jnp.float32(math.pi / 2.0),
                   jnp.where(mid, jnp.float32(math.pi / 4.0), jnp.float32(0.0)))

    z = xr * xr
    poly = (((8.05374449538e-2 * z - 1.38776856032e-1) * z
             + 1.99777106478e-1) * z - 3.33329491539e-1) * z * xr + xr
    return sign * (yb + poly)


def _ciou_elementwise(pred_ref, tgt_ref, eps):
    """Per-box CIoU loss on one (4, TR, 128) pred/target block -> (TR, 128)."""
    b1_x1, b1_y1, b1_x2, b1_y2 = pred_ref[0], pred_ref[1], pred_ref[2], pred_ref[3]
    b2_x1, b2_y1, b2_x2, b2_y2 = tgt_ref[0], tgt_ref[1], tgt_ref[2], tgt_ref[3]

    # intersection
    lt_x = jnp.maximum(b1_x1, b2_x1)
    lt_y = jnp.maximum(b1_y1, b2_y1)
    rb_x = jnp.minimum(b1_x2, b2_x2)
    rb_y = jnp.minimum(b1_y2, b2_y2)
    wi = jnp.maximum(rb_x - lt_x, 0.0)
    hi = jnp.maximum(rb_y - lt_y, 0.0)
    overlap = wi * hi

    # widths / heights
    w1 = b1_x2 - b1_x1
    hh1 = b1_y2 - b1_y1
    w2 = b2_x2 - b2_x1
    hh2 = b2_y2 - b2_y1

    # union & IoU
    union = w1 * hh1 + w2 * hh2 - overlap + eps
    ious = overlap * _recip(union)

    # smallest enclosing box diagonal^2
    cw = jnp.maximum(jnp.maximum(b1_x2, b2_x2) - jnp.minimum(b1_x1, b2_x1), 0.0)
    ch = jnp.maximum(jnp.maximum(b1_y2, b2_y2) - jnp.minimum(b1_y1, b2_y1), 0.0)
    c2 = cw * cw + ch * ch + eps

    # center distance^2
    dx = b2_x1 + b2_x2 - (b1_x1 + b1_x2)
    dy = b2_y1 + b2_y2 - (b1_y1 + b1_y2)
    rho2 = 0.25 * (dx * dx + dy * dy)

    # aspect-ratio consistency term
    h1 = hh1 + eps
    h2 = hh2 + eps
    factor = jnp.float32(4.0 / (math.pi ** 2))
    dv = _atan(w2 * _recip(h2)) - _atan(w1 * _recip(h1))
    v = factor * dv * dv

    # alpha is computed under torch.no_grad(); forward value is identical.
    alpha = (ious > 0.5).astype(jnp.float32) * v * _recip(1.0 - ious + v)

    cious = ious - (rho2 * _recip(c2) + alpha * v)
    return 1.0 - jnp.clip(cious, -1.0, 1.0)


# ----------------------------------------------------------------------------
# Kernels
# ----------------------------------------------------------------------------
def _ciou_none_kernel(pred_ref, tgt_ref, loss_ref, *, eps):
    # pred_ref / tgt_ref: (4, TR, 128) VMEM; loss_ref: (TR, 128) VMEM.
    loss_ref[...] = _ciou_elementwise(pred_ref, tgt_ref, eps)


def _ciou_sum_kernel(n_ref, pred_ref, tgt_ref, psum_ref, *, eps):
    # n_ref: (1,) int32 SMEM (scalar prefetch) = number of valid boxes.
    # pred_ref / tgt_ref: (4, TR, 128) VMEM.
    # psum_ref: (1, 8, 128) VMEM lane-dense partial sum for this grid step.
    tr = pred_ref.shape[1]
    loss = _ciou_elementwise(pred_ref, tgt_ref, eps)      # (TR, 128)

    i = pl.program_id(0)
    last = pl.num_programs(0) - 1

    def _fold(x):
        # (TR, 128) -> (8, 128): sublane-tile-aligned slice adds (pure VALU).
        acc = x[0:8]
        for k in range(1, tr // 8):
            acc = acc + x[8 * k:8 * (k + 1)]
        return acc

    @pl.when(i < last)
    def _():
        psum_ref[...] = _fold(loss)[None]

    @pl.when(i == last)          # only the tail block pays for masking
    def _():
        row = jax.lax.broadcasted_iota(jnp.int32, loss.shape, 0) + i * tr
        lane = jax.lax.broadcasted_iota(jnp.int32, loss.shape, 1)
        gid = row * 128 + lane
        masked = jnp.where(gid < n_ref[0], loss, 0.0)
        psum_ref[...] = _fold(masked)[None]


# ----------------------------------------------------------------------------
# Host-side wrapper
# ----------------------------------------------------------------------------
def _stage_soa(boxes, npad):
    """(N, 4) AoS -> (4, R, 128) SoA, padded with harmless unit boxes.

    Runs inside the same jit as the kernel so XLA fuses pad+transpose into a
    single staging copy.
    """
    # TODO(synk): store boxes coordinate-major upstream to drop this copy.
    n = boxes.shape[0]
    b = boxes.astype(jnp.float32)
    if npad > n:
        dummy = jnp.broadcast_to(
            jnp.asarray([0.0, 0.0, 1.0, 1.0], jnp.float32), (npad - n, 4))
        b = jnp.concatenate([b, dummy], axis=0)
    return b.T.reshape(4, npad // 128, 128)


@functools.partial(jax.jit, static_argnames=("eps", "reduction"))
def _ciou_impl(pred, target, loss_weight, *, eps, reduction):
    n = pred.shape[0]
    rows = max(1, pl.cdiv(n, 128))
    tr = min(64, ((rows + 7) // 8) * 8)          # sublane rows per grid step
    r_pad = ((rows + tr - 1) // tr) * tr
    npad = r_pad * 128
    nblk = r_pad // tr

    p = _stage_soa(pred, npad)                   # (4, r_pad, 128)
    t = _stage_soa(target, npad)

    in_block = (4, tr, 128)

    if reduction == "none":
        per_box = pl.pallas_call(
            functools.partial(_ciou_none_kernel, eps=eps),
            out_shape=jax.ShapeDtypeStruct((r_pad, 128), jnp.float32),
            grid=(nblk,),
            in_specs=[pl.BlockSpec(in_block, lambda i: (0, i, 0)),
                      pl.BlockSpec(in_block, lambda i: (0, i, 0))],
            out_specs=pl.BlockSpec((tr, 128), lambda i: (i, 0)),
            compiler_params=pltpu.CompilerParams(
                dimension_semantics=("parallel",)),
        )(p, t)
        return loss_weight * per_box.reshape(-1)[:n]

    # 'mean' / 'sum': only per-block partial sums leave the kernel.
    n_arr = jnp.full((1,), n, dtype=jnp.int32)   # runtime scalar, not baked
    partials = pl.pallas_call(
        functools.partial(_ciou_sum_kernel, eps=eps),
        out_shape=jax.ShapeDtypeStruct((nblk, 8, 128), jnp.float32),
        grid_spec=pltpu.PrefetchScalarGridSpec(
            num_scalar_prefetch=1,
            grid=(nblk,),
            in_specs=[pl.BlockSpec(in_block, lambda i, n_ref: (0, i, 0)),
                      pl.BlockSpec(in_block, lambda i, n_ref: (0, i, 0))],
            out_specs=pl.BlockSpec((1, 8, 128), lambda i, n_ref: (i, 0, 0)),
        ),
        compiler_params=pltpu.CompilerParams(
            dimension_semantics=("parallel",)),
    )(n_arr, p, t)
    total = jnp.sum(partials)

    if reduction == "sum":
        return loss_weight * total
    # 'mean' (guard n == 0; mmdet guards this via avg_factor)
    return loss_weight * total / max(n, 1)


def ciou_loss_pallas(pred, target, *, eps=1e-6, reduction="mean",
                     loss_weight=1.0):
    """Pallas forward for CIoULoss(eps, reduction, loss_weight)(pred, target)."""
    assert pred.shape == target.shape and pred.shape[-1] == 4
    assert reduction in ("none", "mean", "sum")
    return _ciou_impl(pred, target, jnp.asarray(loss_weight, jnp.float32),
                      eps=float(eps), reduction=reduction)


# ----------------------------------------------------------------------------
# Pure-JAX reference (mirrors the PyTorch ciou_loss, per-box)
# ----------------------------------------------------------------------------
def _ciou_loss_ref(pred, target, eps=1e-6):
    lt = jnp.maximum(pred[:, :2], target[:, :2])
    rb = jnp.minimum(pred[:, 2:], target[:, 2:])
    wh = jnp.maximum(rb - lt, 0.0)
    overlap = wh[:, 0] * wh[:, 1]
    ap = (pred[:, 2] - pred[:, 0]) * (pred[:, 3] - pred[:, 1])
    ag = (target[:, 2] - target[:, 0]) * (target[:, 3] - target[:, 1])
    union = ap + ag - overlap + eps
    ious = overlap / union
    e_lt = jnp.minimum(pred[:, :2], target[:, :2])
    e_rb = jnp.maximum(pred[:, 2:], target[:, 2:])
    e_wh = jnp.maximum(e_rb - e_lt, 0.0)
    c2 = e_wh[:, 0] ** 2 + e_wh[:, 1] ** 2 + eps
    w1, h1 = pred[:, 2] - pred[:, 0], pred[:, 3] - pred[:, 1] + eps
    w2, h2 = target[:, 2] - target[:, 0], target[:, 3] - target[:, 1] + eps
    left = (target[:, 0] + target[:, 2] - (pred[:, 0] + pred[:, 2])) ** 2 / 4
    right = (target[:, 1] + target[:, 3] - (pred[:, 1] + pred[:, 3])) ** 2 / 4
    rho2 = left + right
    factor = 4 / math.pi ** 2
    v = factor * (jnp.arctan(w2 / h2) - jnp.arctan(w1 / h1)) ** 2
    alpha = (ious > 0.5).astype(jnp.float32) * v / (1 - ious + v)
    cious = ious - (rho2 / c2 + alpha * v)
    return 1.0 - jnp.clip(cious, -1.0, 1.0)


if __name__ == "__main__":
    key = jax.random.PRNGKey(0)
    k1, k2, k3, k4 = jax.random.split(key, 4)
    n = 8  # number of boxes

    xy1_p = jax.random.uniform(k1, (n, 2), minval=0.0, maxval=50.0)
    wh_p = jax.random.uniform(k2, (n, 2), minval=1.0, maxval=40.0)
    pred = jnp.concatenate([xy1_p, xy1_p + wh_p], axis=1).astype(jnp.float32)

    xy1_t = jax.random.uniform(k3, (n, 2), minval=0.0, maxval=50.0)
    wh_t = jax.random.uniform(k4, (n, 2), minval=1.0, maxval=40.0)
    target = jnp.concatenate([xy1_t, xy1_t + wh_t], axis=1).astype(jnp.float32)

    # module defaults: eps=1e-6, reduction='mean', loss_weight=1.0
    loss_mean = ciou_loss_pallas(pred, target, eps=1e-6, reduction="mean",
                                 loss_weight=1.0)
    loss_sum = ciou_loss_pallas(pred, target, eps=1e-6, reduction="sum",
                                loss_weight=1.0)
    loss_none = ciou_loss_pallas(pred, target, eps=1e-6, reduction="none",
                                 loss_weight=1.0)
    jax.block_until_ready((loss_mean, loss_sum, loss_none))

    ref_per_box = _ciou_loss_ref(pred, target, eps=1e-6)
    ref_mean = jnp.mean(ref_per_box)
    ref_sum = jnp.sum(ref_per_box)

    assert jnp.allclose(loss_none, ref_per_box, rtol=1e-4, atol=1e-4), (
        loss_none, ref_per_box)
    assert jnp.allclose(loss_mean, ref_mean, rtol=1e-4, atol=1e-4), (
        loss_mean, ref_mean)
    assert jnp.allclose(loss_sum, ref_sum, rtol=1e-4, atol=1e-4), (
        loss_sum, ref_sum)

    print("KERNEL_OK")
</pallas_src>

<mosaic_0001>
module attributes {stable_mosaic.version = 11 : i64} {
  func.func @_ciou_sum_kernel(%arg0: i32, %arg1: memref<1xi32, #tpu.memory_space<smem>>, %arg2: memref<4x8x128xf32, #tpu.memory_space<vmem>>, %arg3: memref<4x8x128xf32, #tpu.memory_space<vmem>>, %arg4: memref<1x8x128xf32, #tpu.memory_space<vmem>>) attributes {dimension_semantics = [#tpu.dimension_semantics<parallel>], iteration_bounds = array<i64: 1>, scalar_prefetch = 1 : i64, scratch_operands = 0 : i64, tpu.core_type = #tpu.core_type<tc>, window_params = [{transform_indices = @transform_0, window_bounds = array<i64: 4, 8, 128>}, {transform_indices = @transform_1, window_bounds = array<i64: 4, 8, 128>}, {transform_indices = @transform_2, window_bounds = array<i64: 1, 8, 128>}]} {
    %c0 = arith.constant 0 : index
    %c0_0 = arith.constant 0 : index
    %c0_1 = arith.constant 0 : index
    %0 = vector.load %arg2[%c0, %c0_0, %c0_1] : memref<4x8x128xf32, #tpu.memory_space<vmem>>, vector<1x8x128xf32>
    %1 = vector.shape_cast %0 : vector<1x8x128xf32> to vector<8x128xf32>
    %c1 = arith.constant 1 : index
    %c0_2 = arith.constant 0 : index
    %c0_3 = arith.constant 0 : index
    %2 = vector.load %arg2[%c1, %c0_2, %c0_3] : memref<4x8x128xf32, #tpu.memory_space<vmem>>, vector<1x8x128xf32>
    %3 = vector.shape_cast %2 : vector<1x8x128xf32> to vector<8x128xf32>
    %c2 = arith.constant 2 : index
    %c0_4 = arith.constant 0 : index
    %c0_5 = arith.constant 0 : index
    %4 = vector.load %arg2[%c2, %c0_4, %c0_5] : memref<4x8x128xf32, #tpu.memory_space<vmem>>, vector<1x8x128xf32>
    %5 = vector.shape_cast %4 : vector<1x8x128xf32> to vector<8x128xf32>
    %c3 = arith.constant 3 : index
    %c0_6 = arith.constant 0 : index
    %c0_7 = arith.constant 0 : index
    %6 = vector.load %arg2[%c3, %c0_6, %c0_7] : memref<4x8x128xf32, #tpu.memory_space<vmem>>, vector<1x8x128xf32>
    %7 = vector.shape_cast %6 : vector<1x8x128xf32> to vector<8x128xf32>
    %c0_8 = arith.constant 0 : index
    %c0_9 = arith.constant 0 : index
    %c0_10 = arith.constant 0 : index
    %8 = vector.load %arg3[%c0_8, %c0_9, %c0_10] : memref<4x8x128xf32, #tpu.memory_space<vmem>>, vector<1x8x128xf32>
    %9 = vector.shape_cast %8 : vector<1x8x128xf32> to vector<8x128xf32>
    %c1_11 = arith.constant 1 : index
    %c0_12 = arith.constant 0 : index
    %c0_13 = arith.constant 0 : index
    %10 = vector.load %arg3[%c1_11, %c0_12, %c0_13] : memref<4x8x128xf32, #tpu.memory_space<vmem>>, vector<1x8x128xf32>
    %11 = vector.shape_cast %10 : vector<1x8x128xf32> to vector<8x128xf32>
    %c2_14 = arith.constant 2 : index
    %c0_15 = arith.constant 0 : index
    %c0_16 = arith.constant 0 : index
    %12 = vector.load %arg3[%c2_14, %c0_15, %c0_16] : memref<4x8x128xf32, #tpu.memory_space<vmem>>, vector<1x8x128xf32>
    %13 = vector.shape_cast %12 : vector<1x8x128xf32> to vector<8x128xf32>
    %c3_17 = arith.constant 3 : index
    %c0_18 = arith.constant 0 : index
    %c0_19 = arith.constant 0 : index
    %14 = vector.load %arg3[%c3_17, %c0_18, %c0_19] : memref<4x8x128xf32, #tpu.memory_space<vmem>>, vector<1x8x128xf32>
    %15 = vector.shape_cast %14 : vector<1x8x128xf32> to vector<8x128xf32>
    %16 = arith.maximumf %1, %9 : vector<8x128xf32>
    %17 = arith.maximumf %3, %11 : vector<8x128xf32>
    %18 = arith.minimumf %5, %13 : vector<8x128xf32>
    %19 = arith.minimumf %7, %15 : vector<8x128xf32>
    %20 = arith.subf %18, %16 : vector<8x128xf32>
    %cst = arith.constant 0.000000e+00 : f32
    %21 = vector.broadcast %cst : f32 to vector<8x128xf32>
    %22 = arith.maximumf %20, %21 : vector<8x128xf32>
    %23 = arith.subf %19, %17 : vector<8x128xf32>
    %cst_20 = arith.constant 0.000000e+00 : f32
    %24 = vector.broadcast %cst_20 : f32 to vector<8x128xf32>
    %25 = arith.maximumf %23, %24 : vector<8x128xf32>
    %26 = arith.mulf %22, %25 : vector<8x128xf32>
    %27 = arith.subf %5, %1 : vector<8x128xf32>
    %28 = arith.subf %7, %3 : vector<8x128xf32>
    %29 = arith.subf %13, %9 : vector<8x128xf32>
    %30 = arith.subf %15, %11 : vector<8x128xf32>
    %31 = arith.mulf %27, %28 : vector<8x128xf32>
    %32 = arith.mulf %29, %30 : vector<8x128xf32>
    %33 = arith.addf %31, %32 : vector<8x128xf32>
    %34 = arith.subf %33, %26 : vector<8x128xf32>
    %cst_21 = arith.constant 9.99999997E-7 : f32
    %35 = vector.broadcast %cst_21 : f32 to vector<8x128xf32>
    %36 = arith.addf %34, %35 : vector<8x128xf32>
    %37 = tpu.reciprocal %36 {approx = true} : vector<8x128xf32> -> vector<8x128xf32>
    %38 = arith.mulf %36, %37 : vector<8x128xf32>
    %cst_22 = arith.constant 2.000000e+00 : f32
    %39 = vector.broadcast %cst_22 : f32 to vector<8x128xf32>
    %40 = arith.subf %39, %38 : vector<8x128xf32>
    %41 = arith.mulf %37, %40 : vector<8x128xf32>
    %42 = arith.mulf %26, %41 : vector<8x128xf32>
    %43 = arith.maximumf %5, %13 : vector<8x128xf32>
    %44 = arith.minimumf %1, %9 : vector<8x128xf32>
    %45 = arith.subf %43, %44 : vector<8x128xf32>
    %cst_23 = arith.constant 0.000000e+00 : f32
    %46 = vector.broadcast %cst_23 : f32 to vector<8x128xf32>
    %47 = arith.maximumf %45, %46 : vector<8x128xf32>
    %48 = arith.maximumf %7, %15 : vector<8x128xf32>
    %49 = arith.minimumf %3, %11 : vector<8x128xf32>
    %50 = arith.subf %48, %49 : vector<8x128xf32>
    %cst_24 = arith.constant 0.000000e+00 : f32
    %51 = vector.broadcast %cst_24 : f32 to vector<8x128xf32>
    %52 = arith.maximumf %50, %51 : vector<8x128xf32>
    %53 = arith.mulf %47, %47 : vector<8x128xf32>
    %54 = arith.mulf %52, %52 : vector<8x128xf32>
    %55 = arith.addf %53, %54 : vector<8x128xf32>
    %cst_25 = arith.constant 9.99999997E-7 : f32
    %56 = vector.broadcast %cst_25 : f32 to vector<8x128xf32>
    %57 = arith.addf %55, %56 : vector<8x128xf32>
    %58 = arith.addf %9, %13 : vector<8x128xf32>
    %59 = arith.addf %1, %5 : vector<8x128xf32>
    %60 = arith.subf %58, %59 : vector<8x128xf32>
    %61 = arith.addf %11, %15 : vector<8x128xf32>
    %62 = arith.addf %3, %7 : vector<8x128xf32>
    %63 = arith.subf %61, %62 : vector<8x128xf32>
    %64 = arith.mulf %60, %60 : vector<8x128xf32>
    %65 = arith.mulf %63, %63 : vector<8x128xf32>
    %66 = arith.addf %64, %65 : vector<8x128xf32>
    %cst_26 = arith.constant 2.500000e-01 : f32
    %67 = vector.broadcast %cst_26 : f32 to vector<8x128xf32>
    %68 = arith.mulf %67, %66 : vector<8x128xf32>
    %cst_27 = arith.constant 9.99999997E-7 : f32
    %69 = vector.broadcast %cst_27 : f32 to vector<8x128xf32>
    %70 = arith.addf %28, %69 : vector<8x128xf32>
    %cst_28 = arith.constant 9.99999997E-7 : f32
    %71 = vector.broadcast %cst_28 : f32 to vector<8x128xf32>
    %72 = arith.addf %30, %71 : vector<8x128xf32>
    %73 = tpu.reciprocal %72 {approx = true} : vector<8x128xf32> -> vector<8x128xf32>
    %74 = arith.mulf %72, %73 : vector<8x128xf32>
    %cst_29 = arith.constant 2.000000e+00 : f32
    %75 = vector.broadcast %cst_29 : f32 to vector<8x128xf32>
    %76 = arith.subf %75, %74 : vector<8x128xf32>
    %77 = arith.mulf %73, %76 : vector<8x128xf32>
    %78 = arith.mulf %29, %77 : vector<8x128xf32>
    %cst_30 = arith.constant 0.000000e+00 : f32
    %79 = vector.broadcast %cst_30 : f32 to vector<8x128xf32>
    %80 = arith.cmpf olt, %78, %79 : vector<8x128xf32>
    %cst_31 = arith.constant -1.000000e+00 : f32
    %cst_32 = arith.constant 1.000000e+00 : f32
    %81 = vector.broadcast %cst_31 : f32 to vector<8x128xf32>
    %82 = vector.broadcast %cst_32 : f32 to vector<8x128xf32>
    %83 = arith.select %80, %81, %82 : vector<8x128xi1>, vector<8x128xf32>
    %84 = math.absf %78 : vector<8x128xf32>
    %cst_33 = arith.constant 2.41421366 : f32
    %85 = vector.broadcast %cst_33 : f32 to vector<8x128xf32>
    %86 = arith.cmpf ogt, %84, %85 : vector<8x128xf32>
    %cst_34 = arith.constant 0.414213568 : f32
    %87 = vector.broadcast %cst_34 : f32 to vector<8x128xf32>
    %88 = arith.cmpf ogt, %84, %87 : vector<8x128xf32>
    %cst_35 = arith.constant 1.000000e-30 : f32
    %89 = vector.broadcast %cst_35 : f32 to vector<8x128xf32>
    %90 = arith.addf %84, %89 : vector<8x128xf32>
    %91 = tpu.reciprocal %90 {approx = true} : vector<8x128xf32> -> vector<8x128xf32>
    %92 = arith.mulf %90, %91 : vector<8x128xf32>
    %cst_36 = arith.constant 2.000000e+00 : f32
    %93 = vector.broadcast %cst_36 : f32 to vector<8x128xf32>
    %94 = arith.subf %93, %92 : vector<8x128xf32>
    %95 = arith.mulf %91, %94 : vector<8x128xf32>
    %cst_37 = arith.constant 0.000000e+00 : f32
    %96 = vector.broadcast %cst_37 : f32 to vector<8x128xf32>
    %97 = arith.subf %96, %95 : vector<8x128xf32>
    %cst_38 = arith.constant 1.000000e+00 : f32
    %98 = vector.broadcast %cst_38 : f32 to vector<8x128xf32>
    %99 = arith.subf %84, %98 : vector<8x128xf32>
    %cst_39 = arith.constant 1.000000e+00 : f32
    %100 = vector.broadcast %cst_39 : f32 to vector<8x128xf32>
    %101 = arith.addf %84, %100 : vector<8x128xf32>
    %102 = tpu.reciprocal %101 {approx = true} : vector<8x128xf32> -> vector<8x128xf32>
    %103 = arith.mulf %101, %102 : vector<8x128xf32>
    %cst_40 = arith.constant 2.000000e+00 : f32
    %104 = vector.broadcast %cst_40 : f32 to vector<8x128xf32>
    %105 = arith.subf %104, %103 : vector<8x128xf32>
    %106 = arith.mulf %102, %105 : vector<8x128xf32>
    %107 = arith.mulf %99, %106 : vector<8x128xf32>
    %108 = arith.select %88, %107, %84 : vector<8x128xi1>, vector<8x128xf32>
    %109 = arith.select %86, %97, %108 : vector<8x128xi1>, vector<8x128xf32>
    %cst_41 = arith.constant 0.785398185 : f32
    %cst_42 = arith.constant 0.000000e+00 : f32
    %110 = vector.broadcast %cst_41 : f32 to vector<8x128xf32>
    %111 = vector.broadcast %cst_42 : f32 to vector<8x128xf32>
    %112 = arith.select %88, %110, %111 : vector<8x128xi1>, vector<8x128xf32>
    %cst_43 = arith.constant 1.57079637 : f32
    %113 = vector.broadcast %cst_43 : f32 to vector<8x128xf32>
    %114 = arith.select %86, %113, %112 : vector<8x128xi1>, vector<8x128xf32>
    %115 = arith.mulf %109, %109 : vector<8x128xf32>
    %cst_44 = arith.constant 0.0805374458 : f32
    %116 = vector.broadcast %cst_44 : f32 to vector<8x128xf32>
    %117 = arith.mulf %116, %115 : vector<8x128xf32>
    %cst_45 = arith.constant 0.138776854 : f32
    %118 = vector.broadcast %cst_45 : f32 to vector<8x128xf32>
    %119 = arith.subf %117, %118 : vector<8x128xf32>
    %120 = arith.mulf %119, %115 : vector<8x128xf32>
    %cst_46 = arith.constant 0.199777111 : f32
    %121 = vector.broadcast %cst_46 : f32 to vector<8x128xf32>
    %122 = arith.addf %120, %121 : vector<8x128xf32>
    %123 = arith.mulf %122, %115 : vector<8x128xf32>
    %cst_47 = arith.constant 0.333329499 : f32
    %124 = vector.broadcast %cst_47 : f32 to vector<8x128xf32>
    %125 = arith.subf %123, %124 : vector<8x128xf32>
    %126 = arith.mulf %125, %115 : vector<8x128xf32>
    %127 = arith.mulf %126, %109 : vector<8x128xf32>
    %128 = arith.addf %127, %109 : vector<8x128xf32>
    %129 = arith.addf %114, %128 : vector<8x128xf32>
    %130 = arith.mulf %83, %129 : vector<8x128xf32>
    %131 = tpu.reciprocal %70 {approx = true} : vector<8x128xf32> -> vector<8x128xf32>
    %132 = arith.mulf %70, %131 : vector<8x128xf32>
    %cst_48 = arith.constant 2.000000e+00 : f32
    %133 = vector.broadcast %cst_48 : f32 to vector<8x128xf32>
    %134 = arith.subf %133, %132 : vector<8x128xf32>
    %135 = arith.mulf %131, %134 : vector<8x128xf32>
    %136 = arith.mulf %27, %135 : vector<8x128xf32>
    %cst_49 = arith.constant 0.000000e+00 : f32
    %137 = vector.broadcast %cst_49 : f32 to vector<8x128xf32>
    %138 = arith.cmpf olt, %136, %137 : vector<8x128xf32>
    %cst_50 = arith.constant -1.000000e+00 : f32
    %cst_51 = arith.constant 1.000000e+00 : f32
    %139 = vector.broadcast %cst_50 : f32 to vector<8x128xf32>
    %140 = vector.broadcast %cst_51 : f32 to vector<8x128xf32>
    %141 = arith.select %138, %139, %140 : vector<8x128xi1>, vector<8x128xf32>
    %142 = math.absf %136 : vector<8x128xf32>
    %cst_52 = arith.constant 2.41421366 : f32
    %143 = vector.broadcast %cst_52 : f32 to vector<8x128xf32>
    %144 = arith.cmpf ogt, %142, %143 : vector<8x128xf32>
    %cst_53 = arith.constant 0.414213568 : f32
    %145 = vector.broadcast %cst_53 : f32 to vector<8x128xf32>
    %146 = arith.cmpf ogt, %142, %145 : vector<8x128xf32>
    %cst_54 = arith.constant 1.000000e-30 : f32
    %147 = vector.broadcast %cst_54 : f32 to vector<8x128xf32>
    %148 = arith.addf %142, %147 : vector<8x128xf32>
    %149 = tpu.reciprocal %148 {approx = true} : vector<8x128xf32> -> vector<8x128xf32>
    %150 = arith.mulf %148, %149 : vector<8x128xf32>
    %cst_55 = arith.constant 2.000000e+00 : f32
    %151 = vector.broadcast %cst_55 : f32 to vector<8x128xf32>
    %152 = arith.subf %151, %150 : vector<8x128xf32>
    %153 = arith.mulf %149, %152 : vector<8x128xf32>
    %cst_56 = arith.constant 0.000000e+00 : f32
    %154 = vector.broadcast %cst_56 : f32 to vector<8x128xf32>
    %155 = arith.subf %154, %153 : vector<8x128xf32>
    %cst_57 = arith.constant 1.000000e+00 : f32
    %156 = vector.broadcast %cst_57 : f32 to vector<8x128xf32>
    %157 = arith.subf %142, %156 : vector<8x128xf32>
    %cst_58 = arith.constant 1.000000e+00 : f32
    %158 = vector.broadcast %cst_58 : f32 to vector<8x128xf32>
    %159 = arith.addf %142, %158 : vector<8x128xf32>
    %160 = tpu.reciprocal %159 {approx = true} : vector<8x128xf32> -> vector<8x128xf32>
    %161 = arith.mulf %159, %160 : vector<8x128xf32>
    %cst_59 = arith.constant 2.000000e+00 : f32
    %162 = vector.broadcast %cst_59 : f32 to vector<8x128xf32>
    %163 = arith.subf %162, %161 : vector<8x128xf32>
    %164 = arith.mulf %160, %163 : vector<8x128xf32>
    %165 = arith.mulf %157, %164 : vector<8x128xf32>
    %166 = arith.select %146, %165, %142 : vector<8x128xi1>, vector<8x128xf32>
    %167 = arith.select %144, %155, %166 : vector<8x128xi1>, vector<8x128xf32>
    %cst_60 = arith.constant 0.785398185 : f32
    %cst_61 = arith.constant 0.000000e+00 : f32
    %168 = vector.broadcast %cst_60 : f32 to vector<8x128xf32>
    %169 = vector.broadcast %cst_61 : f32 to vector<8x128xf32>
    %170 = arith.select %146, %168, %169 : vector<8x128xi1>, vector<8x128xf32>
    %cst_62 = arith.constant 1.57079637 : f32
    %171 = vector.broadcast %cst_62 : f32 to vector<8x128xf32>
    %172 = arith.select %144, %171, %170 : vector<8x128xi1>, vector<8x128xf32>
    %173 = arith.mulf %167, %167 : vector<8x128xf32>
    %cst_63 = arith.constant 0.0805374458 : f32
    %174 = vector.broadcast %cst_63 : f32 to vector<8x128xf32>
    %175 = arith.mulf %174, %173 : vector<8x128xf32>
    %cst_64 = arith.constant 0.138776854 : f32
    %176 = vector.broadcast %cst_64 : f32 to vector<8x128xf32>
    %177 = arith.subf %175, %176 : vector<8x128xf32>
    %178 = arith.mulf %177, %173 : vector<8x128xf32>
    %cst_65 = arith.constant 0.199777111 : f32
    %179 = vector.broadcast %cst_65 : f32 to vector<8x128xf32>
    %180 = arith.addf %178, %179 : vector<8x128xf32>
    %181 = arith.mulf %180, %173 : vector<8x128xf32>
    %cst_66 = arith.constant 0.333329499 : f32
    %182 = vector.broadcast %cst_66 : f32 to vector<8x128xf32>
    %183 = arith.subf %181, %182 : vector<8x128xf32>
    %184 = arith.mulf %183, %173 : vector<8x128xf32>
    %185 = arith.mulf %184, %167 : vector<8x128xf32>
    %186 = arith.addf %185, %167 : vector<8x128xf32>
    %187 = arith.addf %172, %186 : vector<8x128xf32>
    %188 = arith.mulf %141, %187 : vector<8x128xf32>
    %189 = arith.subf %130, %188 : vector<8x128xf32>
    %cst_67 = arith.constant 0.405284733 : f32
    %190 = vector.broadcast %cst_67 : f32 to vector<8x128xf32>
    %191 = arith.mulf %190, %189 : vector<8x128xf32>
    %192 = arith.mulf %191, %189 : vector<8x128xf32>
    %cst_68 = arith.constant 5.000000e-01 : f32
    %193 = vector.broadcast %cst_68 : f32 to vector<8x128xf32>
    %194 = arith.cmpf ogt, %42, %193 : vector<8x128xf32>
    %195 = arith.extui %194 : vector<8x128xi1> to vector<8x128xi32>
    %196 = arith.sitofp %195 : vector<8x128xi32> to vector<8x128xf32>
    %197 = arith.mulf %196, %192 : vector<8x128xf32>
    %cst_69 = arith.constant 1.000000e+00 : f32
    %198 = vector.broadcast %cst_69 : f32 to vector<8x128xf32>
    %199 = arith.subf %198, %42 : vector<8x128xf32>
    %200 = arith.addf %199, %192 : vector<8x128xf32>
    %201 = tpu.reciprocal %200 {approx = true} : vector<8x128xf32> -> vector<8x128xf32>
    %202 = arith.mulf %200, %201 : vector<8x128xf32>
    %cst_70 = arith.constant 2.000000e+00 : f32
    %203 = vector.broadcast %cst_70 : f32 to vector<8x128xf32>
    %204 = arith.subf %203, %202 : vector<8x128xf32>
    %205 = arith.mulf %201, %204 : vector<8x128xf32>
    %206 = arith.mulf %197, %205 : vector<8x128xf32>
    %207 = tpu.reciprocal %57 {approx = true} : vector<8x128xf32> -> vector<8x128xf32>
    %208 = arith.mulf %57, %207 : vector<8x128xf32>
    %cst_71 = arith.constant 2.000000e+00 : f32
    %209 = vector.broadcast %cst_71 : f32 to vector<8x128xf32>
    %210 = arith.subf %209, %208 : vector<8x128xf32>
    %211 = arith.mulf %207, %210 : vector<8x128xf32>
    %212 = arith.mulf %68, %211 : vector<8x128xf32>
    %213 = arith.mulf %206, %192 : vector<8x128xf32>
    %214 = arith.addf %212, %213 : vector<8x128xf32>
    %215 = arith.subf %42, %214 : vector<8x128xf32>
    %cst_72 = arith.constant -1.000000e+00 : f32
    %cst_73 = arith.constant 1.000000e+00 : f32
    %216 = vector.broadcast %cst_72 : f32 to vector<8x128xf32>
    %217 = arith.maximumf %216, %215 : vector<8x128xf32>
    %218 = vector.broadcast %cst_73 : f32 to vector<8x128xf32>
    %219 = arith.minimumf %218, %217 : vector<8x128xf32>
    %cst_74 = arith.constant 1.000000e+00 : f32
    %220 = vector.broadcast %cst_74 : f32 to vector<8x128xf32>
    %221 = arith.subf %220, %219 : vector<8x128xf32>
    %c0_i32 = arith.constant 0 : i32
    %222 = arith.cmpi slt, %arg0, %c0_i32 : i32
    %223 = arith.extui %222 : i1 to i32
    %c0_i32_75 = arith.constant 0 : i32
    %224 = arith.cmpi ne, %223, %c0_i32_75 : i32
    scf.if %224 {
      %228 = vector.shape_cast %221 : vector<8x128xf32> to vector<1x8x128xf32>
      %c0_78 = arith.constant 0 : index
      %c0_79 = arith.constant 0 : index
      %c0_80 = arith.constant 0 : index
      %229 = vector.load %arg4[%c0_78, %c0_79, %c0_80] : memref<1x8x128xf32, #tpu.memory_space<vmem>>, vector<1x8x128xf32>
      tpu.vector_store %arg4[%c0_78, %c0_79, %c0_80], %228 {strides = array<i32>} : memref<1x8x128xf32, #tpu.memory_space<vmem>>, vector<1x8x128xf32>,
    } else {
    }
    %c0_i32_76 = arith.constant 0 : i32
    %225 = arith.cmpi eq, %arg0, %c0_i32_76 : i32
    %226 = arith.extui %225 : i1 to i32
    %c0_i32_77 = arith.constant 0 : i32
    %227 = arith.cmpi ne, %226, %c0_i32_77 : i32
    scf.if %227 {
      %228 = tpu.iota {dimensions = array<i32: 0>} : vector<8x128xi32>
      %c8_i32 = arith.constant 8 : i32
      %229 = arith.muli %arg0, %c8_i32 : i32
      %230 = vector.broadcast %229 : i32 to vector<8x128xi32>
      %231 = arith.addi %228, %230 : vector<8x128xi32>
      %232 = tpu.iota {dimensions = array<i32: 1>} : vector<8x128xi32>
      %c128_i32 = arith.constant 128 : i32
      %233 = vector.broadcast %c128_i32 : i32 to vector<8x128xi32>
      %234 = arith.muli %231, %233 : vector<8x128xi32>
      %235 = arith.addi %234, %232 : vector<8x128xi32>
      %c0_78 = arith.constant 0 : index
      %236 = memref.load %arg1[%c0_78] : memref<1xi32, #tpu.memory_space<smem>>
      %237 = vector.broadcast %236 : i32 to vector<8x128xi32>
      %238 = arith.cmpi slt, %235, %237 : vector<8x128xi32>
      %cst_79 = arith.constant 0.000000e+00 : f32
      %239 = vector.broadcast %cst_79 : f32 to vector<8x128xf32>
      %240 = arith.select %238, %221, %239 : vector<8x128xi1>, vector<8x128xf32>
      %241 = vector.shape_cast %240 : vector<8x128xf32> to vector<1x8x128xf32>
      %c0_80 = arith.constant 0 : index
      %c0_81 = arith.constant 0 : index
      %c0_82 = arith.constant 0 : index
      %242 = vector.load %arg4[%c0_80, %c0_81, %c0_82] : memref<1x8x128xf32, #tpu.memory_space<vmem>>, vector<1x8x128xf32>
      tpu.vector_store %arg4[%c0_80, %c0_81, %c0_82], %241 {strides = array<i32>} : memref<1x8x128xf32, #tpu.memory_space<vmem>>, vector<1x8x128xf32>,
    } else {
    }
    return
  }
  func.func @transform_0(%arg0: i32, %arg1: memref<1xi32, #tpu.memory_space<smem>>) -> (i32, i32, i32) {
    %c0_i32 = arith.constant 0 : i32
    %c0_i32_0 = arith.constant 0 : i32
    %c0_i32_1 = arith.constant 0 : i32
    return %c0_i32, %arg0, %c0_i32_0 : i32, i32, i32
  }
  func.func @transform_1(%arg0: i32, %arg1: memref<1xi32, #tpu.memory_space<smem>>) -> (i32, i32, i32) {
    %c0_i32 = arith.constant 0 : i32
    %c0_i32_0 = arith.constant 0 : i32
    %c0_i32_1 = arith.constant 0 : i32
    return %c0_i32, %arg0, %c0_i32_0 : i32, i32, i32
  }
  func.func @transform_2(%arg0: i32, %arg1: memref<1xi32, #tpu.memory_space<smem>>) -> (i32, i32, i32) {
    %c0_i32 = arith.constant 0 : i32
    %c0_i32_0 = arith.constant 0 : i32
    %c0_i32_1 = arith.constant 0 : i32
    return %arg0, %c0_i32, %c0_i32_0 : i32, i32, i32
  }
}

</mosaic_0001>

<llo_original>
// kernel: _ciou_impl.1
$region0: #{_ciou_impl.1}
  #allocation0 [shape = 'u32[]', space=smem, size = 0x4, offset = 0x4, fixed_abs, tag = 'smem constant byte address 0x4 - core index']
  #allocation1 [shape = 'u32[72,128]{1,0:T(1,128)}', space=vmem, size = 0x9000, scoped, tag = 'internal scratch']
  #allocation2 [shape = 's32[1]{0}', space=sflag, size = 0x4, scoped, tag = 'scoped memory for _ciou_impl.1']
  #allocation3 [shape = 's32[1]{0:T(128)S(6)}', space=smem, size = 0x200, scoped, tag = 'prefetched SMEM operand 0']
  %s0 = inlined_call_operand.<no memory space> [shape: s32[1], index: 0, kind: input, shape index: {}]
  %s1 = inlined_call_operand.vmem [shape: f32[4,8,128], index: 1, kind: input, shape index: {}]
  %s2 = inlined_call_operand.vmem [shape: f32[4,8,128], index: 2, kind: input, shape index: {}]
  %s3 = inlined_call_operand.vmem [shape: f32[1,8,128], index: 3, kind: output, shape index: {}]
  %s4 = sld [smem:[#allocation0]]
  $region26: #{_ciou_impl.1} parent=0
    _
  %s6 = ssub.s32 1, %s4
  %s7 = scalar_select 0, %s6, %s4
  %8 = sst [smem:[#allocation3]] %s0
  // Predicated region
  $region2: #{_ciou_impl.1} parent=0 // pred_check
    _
  $region3: #{_ciou_impl.1} parent=0 // pred_check_branch
    %10 = sbr.rel (0) target = $region5
  $region4: #{_ciou_impl.1} parent=0 // pred_region
    _
  $region5: #{_ciou_impl.1} parent=0 // pred_fallthru
    _
  // Predicated region
  $region6: #{_ciou_impl.1} parent=0 // pred_check
    _
  $region7: #{_ciou_impl.1} parent=0 // pred_check_branch
    %12 = sbr.rel (0) target = $region9
  $region8: #{_ciou_impl.1} parent=0 // pred_region
    _
  $region9: #{_ciou_impl.1} parent=0 // pred_fallthru
    _
  %v13 = vld [vmem:[%s1] sm:$0xff]
  %s14 = scalar_lea.vmem %s1, 8
  %v15 = vld [vmem:[%s14] sm:$0xff]
  %s16 = scalar_lea.vmem %s1, 16
  %v17 = vld [vmem:[%s16] sm:$0xff]
  %s18 = scalar_lea.vmem %s1, 24
  %v19 = vld [vmem:[%s18] sm:$0xff]
  %v20 = vld [vmem:[%s2] sm:$0xff]
  %s21 = scalar_lea.vmem %s2, 8
  %v22 = vld [vmem:[%s21] sm:$0xff]
  %s23 = scalar_lea.vmem %s2, 16
  %v24 = vld [vmem:[%s23] sm:$0xff]
  %s25 = scalar_lea.vmem %s2, 24
  %v26 = vld [vmem:[%s25] sm:$0xff]
  %v27 = vmax.f32 %v13, %v20
  %v28 = vmax.f32 %v15, %v22
  %v29 = vmin.f32 %v17, %v24
  %v30 = vmin.f32 %v19, %v26
  %v31 = vsub.f32 %v29, %v27
  %v32 = vmax.f32 %v31, 0.0
  %v33 = vsub.f32 %v30, %v28
  %v34 = vmax.f32 %v33, 0.0
  %v35 = vmul.f32 %v32, %v34
  %v36 = vsub.f32 %v17, %v13
  %v37 = vsub.f32 %v19, %v15
  %v38 = vsub.f32 %v24, %v20
  %v39 = vsub.f32 %v26, %v22
  %v40 = vmul.f32 %v36, %v37
  %v41 = vmul.f32 %v38, %v39
  %v42 = vadd.f32 %v40, %v41
  %v43 = vsub.f32 %v42, %v35
  %v44 = vadd.f32 %v43, 1e-06
  %v45 = vrcp.pop %v44
  %v46 = vmul.f32 %v44, %v45
  %v47 = vsub.f32 2.0, %v46
  %v48 = vmul.f32 %v45, %v47
  %v49 = vmul.f32 %v35, %v48
  %v50 = vmax.f32 %v17, %v24
  %v51 = vmin.f32 %v13, %v20
  %v52 = vsub.f32 %v50, %v51
  %v53 = vmax.f32 %v52, 0.0
  %v54 = vmax.f32 %v19, %v26
  %v55 = vmin.f32 %v15, %v22
  %v56 = vsub.f32 %v54, %v55
  %v57 = vmax.f32 %v56, 0.0
  %v58 = vmul.f32 %v53, %v53
  %v59 = vmul.f32 %v57, %v57
  %v60 = vadd.f32 %v58, %v59
  %v61 = vadd.f32 %v60, 1e-06
  %v62 = vadd.f32 %v20, %v24
  %v63 = vadd.f32 %v13, %v17
  %v64 = vsub.f32 %v62, %v63
  %v65 = vadd.f32 %v22, %v26
  %v66 = vadd.f32 %v15, %v19
  %v67 = vsub.f32 %v65, %v66
  %v68 = vmul.f32 %v64, %v64
  %v69 = vmul.f32 %v67, %v67
  %v70 = vadd.f32 %v68, %v69
  %v71 = vmul.f32 %v70, 0.25
  %v72 = vadd.f32 %v37, 1e-06
  %v73 = vadd.f32 %v39, 1e-06
  %v74 = vrcp.pop %v73
  %v75 = vmul.f32 %v73, %v74
  %v76 = vsub.f32 2.0, %v75
  %v77 = vmul.f32 %v74, %v76
  %v78 = vmul.f32 %v38, %v77
  %vm79 = vcmp.lt.f32.partialorder %v78, 0.0
  %v80 = vsel %vm79, -1.0, 1.0
  %v81 = vand.u32 2147483647, %v78
  %vm82 = vcmp.gt.f32.partialorder %v81, 2.4142137
  %vm83 = vcmp.gt.f32.partialorder %v81, 0.41421357
  %v84 = vadd.f32 %v81, 1e-30
  %v85 = vrcp.pop %v84
  %v86 = vmul.f32 %v84, %v85
  %v87 = vsub.f32 2.0, %v86
  %v88 = vmul.f32 %v85, %v87
  %v89 = vsub.f32 0.0, %v88
  %v90 = vsub.f32 %v81, 1.0
  %v91 = vadd.f32 %v81, 1.0
  %v92 = vrcp.pop %v91
  %v93 = vmul.f32 %v91, %v92
  %v94 = vsub.f32 2.0, %v93
  %v95 = vmul.f32 %v92, %v94
  %v96 = vmul.f32 %v90, %v95
  %v97 = vsel %vm83, %v96, %v81
  %v98 = vsel %vm82, %v89, %v97
  %v99 = vsel %vm83, 0.7853982, 0.0
  %v100 = vsel %vm82, 1.5707964, %v99
  %v101 = vmul.f32 %v98, %v98
  %v102 = vmul.f32 %v101, 0.080537446
  %v103 = vsub.f32 %v102, 0.13877685
  %v104 = vmul.f32 %v103, %v101
  %v105 = vadd.f32 %v104, 0.19977711
  %v106 = vmul.f32 %v105, %v101
  %v107 = vsub.f32 %v106, 0.3333295
  %v108 = vmul.f32 %v107, %v101
  %v109 = vmul.f32 %v108, %v98
  %v110 = vadd.f32 %v109, %v98
  %v111 = vadd.f32 %v100, %v110
  %v112 = vmul.f32 %v80, %v111
  %v113 = vrcp.pop %v72
  %v114 = vmul.f32 %v72, %v113
  %v115 = vsub.f32 2.0, %v114
  %v116 = vmul.f32 %v113, %v115
  %v117 = vmul.f32 %v36, %v116
  %vm118 = vcmp.lt.f32.partialorder %v117, 0.0
  %v119 = vsel %vm118, -1.0, 1.0
  %v120 = vand.u32 2147483647, %v117
  %vm121 = vcmp.gt.f32.partialorder %v120, 2.4142137
  %vm122 = vcmp.gt.f32.partialorder %v120, 0.41421357
  %v123 = vadd.f32 %v120, 1e-30
  %v124 = vrcp.pop %v123
  %v125 = vmul.f32 %v123, %v124
  %v126 = vsub.f32 2.0, %v125
  %v127 = vmul.f32 %v124, %v126
  %v128 = vsub.f32 0.0, %v127
  %v129 = vsub.f32 %v120, 1.0
  %v130 = vadd.f32 %v120, 1.0
  %v131 = vrcp.pop %v130
  %v132 = vmul.f32 %v130, %v131
  %v133 = vsub.f32 2.0, %v132
  %v134 = vmul.f32 %v131, %v133
  %v135 = vmul.f32 %v129, %v134
  %v136 = vsel %vm122, %v135, %v120
  %v137 = vsel %vm121, %v128, %v136
  %v138 = vsel %vm122, 0.7853982, 0.0
  %v139 = vsel %vm121, 1.5707964, %v138
  %v140 = vmul.f32 %v137, %v137
  %v141 = vmul.f32 %v140, 0.080537446
  %v142 = vsub.f32 %v141, 0.13877685
  %v143 = vmul.f32 %v142, %v140
  %v144 = vadd.f32 %v143, 0.19977711
  %v145 = vmul.f32 %v144, %v140
  %v146 = vsub.f32 %v145, 0.3333295
  %v147 = vmul.f32 %v146, %v140
  %v148 = vmul.f32 %v147, %v137
  %v149 = vadd.f32 %v148, %v137
  %v150 = vadd.f32 %v139, %v149
  %v151 = vmul.f32 %v119, %v150
  %v152 = vsub.f32 %v112, %v151
  %v153 = vmul.f32 %v152, 0.40528473
  %v154 = vmul.f32 %v153, %v152
  %vm155 = vcmp.gt.f32.partialorder %v49, 0.5
  %v156 = vsel %vm155, 1, 0
  %v157 = vcvt.s32.f32 %v156
  %v158 = vmul.f32 %v157, %v154
  %v159 = vsub.f32 1.0, %v49
  %v160 = vadd.f32 %v159, %v154
  %v161 = vrcp.pop %v160
  %v162 = vmul.f32 %v160, %v161
  %v163 = vsub.f32 2.0, %v162
  %v164 = vmul.f32 %v161, %v163
  %v165 = vmul.f32 %v158, %v164
  %v166 = vrcp.pop %v61
  %v167 = vmul.f32 %v61, %v166
  %v168 = vsub.f32 2.0, %v167
  %v169 = vmul.f32 %v166, %v168
  %v170 = vmul.f32 %v71, %v169
  %v171 = vmul.f32 %v165, %v154
  %v172 = vadd.f32 %v170, %v171
  %v173 = vsub.f32 %v49, %v172
  %v174 = vmax.f32 %v173, -1.0
  %v175 = vmin.f32 %v174, 1.0
  %v176 = vsub.f32 1.0, %v175
  %p177 = scmp.lt.s32.totalorder 0, 0
  // Predicated region
  $region10: #{_ciou_impl.1} parent=0 // pred_check
    %p178 = pneg %p177
  $region11: #{_ciou_impl.1} parent=0 // pred_check_branch
    %180 = sbr.rel (%p178) target = $region13
  $region12: #{_ciou_impl.1} parent=0 // pred_region
    %181 = vst [vmem:[%s3] sm:$0xff] %v176
  $region13: #{_ciou_impl.1} parent=0 // pred_fallthru
    _
  %p182 = scmp.eq.s32.totalorder 0, 0
  // Predicated region
  $region14: #{_ciou_impl.1} parent=0 // pred_check
    %p183 = pneg %p182
  $region15: #{_ciou_impl.1} parent=0 // pred_check_branch
    %185 = sbr.rel (%p183) target = $region17
  $region16: #{_ciou_impl.1} parent=0 // pred_region
    %v186 = vlaneseq
    %v187 = vshrl.u32 %v186, 7
    %s188 = smul.u32 0, 8
    %v189 = vstv %s188
    %v190 = vadd.s32 %v187, %v189
    %v191 = vlaneseq
    %v192 = vand.u32 %v191, 127
    %v193 = vmul.u32 %v190, 128
    %v194 = vadd.s32 %v193, %v192
    %s195 = sld [smem:[#allocation3]]
    %v196 = vstv %s195
    %vm197 = vcmp.lt.s32.totalorder %v194, %v196
    %v198 = vsel %vm197, %v176, 0.0
    %199 = vst [vmem:[%s3] sm:$0xff] %v198
  $region17: #{_ciou_impl.1} parent=0 // pred_fallthru
    _
  // Predicated region
  $region18: #{_ciou_impl.1} parent=0 // pred_check
    _
  $region19: #{_ciou_impl.1} parent=0 // pred_check_branch
    %201 = sbr.rel (0) target = $region21
  $region20: #{_ciou_impl.1} parent=0 // pred_region
    _
  $region21: #{_ciou_impl.1} parent=0 // pred_fallthru
    _
  // Predicated region
  $region22: #{_ciou_impl.1} parent=0 // pred_check
    _
  $region23: #{_ciou_impl.1} parent=0 // pred_check_branch
    %203 = sbr.rel (0) target = $region25
  $region24: #{_ciou_impl.1} parent=0 // pred_region
    _
  $region25: #{_ciou_impl.1} parent=0 // pred_fallthru
    _

</llo_original>
